<compile_context>
chip_gen: v7x
topology: tpu7x:2x2x1
jax: 0.10.0
libtpu: 0.0.40
codegen_flags: <defaults>
</compile_context>

<pallas_src>
import math
import functools

import jax
import jax.numpy as jnp
from jax.experimental import pallas as pl
from jax.experimental.pallas import tpu as pltpu


def _build_pos_encoding(emb_dim: int, max_len: int = 512) -> jnp.ndarray:
    """Deterministic sinusoidal table, identical math to the PyTorch __init__."""
    position = jnp.arange(0, max_len, dtype=jnp.float32)[:, None]            # (L, 1)
    div_term = jnp.exp(
        jnp.arange(0, emb_dim, 2, dtype=jnp.float32)
        * -(math.log(10000.0) / emb_dim)
    )                                                                         # (E/2,)
    pe = jnp.zeros((max_len, emb_dim), dtype=jnp.float32)
    pe = pe.at[:, 0::2].set(jnp.sin(position * div_term))
    pe = pe.at[:, 1::2].set(jnp.cos(position * div_term))
    return pe                                                                 # (L, E)


# --------------------------- kernels ----------------------------------------


def _pe_add_kernel(x_ref, pe_ref, o_ref):
    # Same-shaped (ROWS, T) tiles -> plain VPU add, no per-step broadcast.
    o_ref[...] = (x_ref[...] + pe_ref[...]).astype(o_ref.dtype)


def _pe_add_dropout_kernel(x_ref, pe_ref, u_ref, o_ref, *, drop_p, inv_keep):
    y = x_ref[...] + pe_ref[...]
    keep = u_ref[...] >= jnp.float32(drop_p)            # P(keep) = 1 - drop_p
    o_ref[...] = jnp.where(keep, y * inv_keep,
                           jnp.zeros_like(y)).astype(o_ref.dtype)


# --------------------------- tiling ------------------------------------------


def _choose_tiling(batch, n, itemsize, target_block_bytes):
    """Lane width T, rows-per-batch Rp, block rows ROWS, and #row tiles.

    ROWS is always a multiple of Rp (so pe tiles evenly into a block) and
    either a multiple of 8 sublanes or the full row extent (single tile).
    """
    T = None
    for cand in (512, 256, 128):
        if n % cand == 0:
            T = cand
            break
    if T is None:
        # TODO(synk): pad S*E up to a multiple of 128 instead; this fallback
        # uses a full-extent last dim (legal, but masked partial stores).
        T = n
    rp = n // T
    total_rows = batch * rp
    slab_bytes = rp * T * itemsize                      # one batch element
    bpt = max(1, target_block_bytes // max(slab_bytes, 1))   # batches per tile
    if bpt < batch:
        # Block rows (bpt*rp) must be a multiple of 8 sublanes when not
        # covering the full row extent.
        g = 8 // math.gcd(rp, 8)
        bpt = max(g, (bpt // g) * g)
    if bpt >= batch:
        rows = total_rows                               # single full-extent tile
        num_tiles = 1
    else:
        rows = bpt * rp
        num_tiles = pl.cdiv(total_rows, rows)           # ragged last block OK
    return T, rp, rows, num_tiles


# --------------------------- wrapper -----------------------------------------


def positional_encoding_forward(x, pos_encoding, *, dropout_p=0.1, train=False,
                                rng_key=None,
                                target_block_bytes=2 * 1024 * 1024):
    """x: (B, S, E); pos_encoding: (max_len, E). Returns dropout(x + pe[:S])."""
    B, S, E = x.shape
    N = S * E
    dtype = x.dtype
    itemsize = int(jnp.dtype(dtype).itemsize)

    T, Rp, ROWS, num_tiles = _choose_tiling(B, N, itemsize, target_block_bytes)

    # Lane-dense flattened views; batch folded into the row axis.
    x2 = x.reshape(B * Rp, T)
    pe_slab = pos_encoding[:S, :].astype(dtype).reshape(Rp, T)
    reps = ROWS // Rp
    pe2 = jnp.tile(pe_slab, (reps, 1)) if reps > 1 else pe_slab   # (ROWS, T)

    out_shape = jax.ShapeDtypeStruct((B * Rp, T), dtype)
    grid = (num_tiles,)
    tile_spec = pl.BlockSpec((ROWS, T), lambda r: (r, 0))
    # Constant block index -> pe stays resident in VMEM, DMA'd only once.
    pe_spec = pl.BlockSpec((ROWS, T), lambda r: (0, 0))
    compiler_params = pltpu.CompilerParams(
        dimension_semantics=("parallel",),
        vmem_limit_bytes=32 * 1024 * 1024)

    use_dropout = bool(train) and float(dropout_p) > 0.0
    if use_dropout and float(dropout_p) >= 1.0:
        raise ValueError("dropout_p must be < 1.0")

    if not use_dropout:
        cost = pl.CostEstimate(
            flops=B * N, transcendentals=0,
            bytes_accessed=2 * B * N * itemsize + ROWS * T * itemsize)
        out2 = pl.pallas_call(
            _pe_add_kernel,
            out_shape=out_shape,
            grid=grid,
            in_specs=[tile_spec, pe_spec],
            out_specs=tile_spec,
            compiler_params=compiler_params,
            cost_estimate=cost,
        )(x2, pe2)
    else:
        if rng_key is None:
            rng_key = jax.random.PRNGKey(0)
        # TODO(synk): dropout mask uses JAX's RNG, not torch's stream; same
        # distribution and 1/(1-p) scaling, different bits.
        u2 = jax.random.uniform(rng_key, (B * Rp, T), dtype=jnp.float32)
        kernel = functools.partial(_pe_add_dropout_kernel,
                                   drop_p=float(dropout_p),
                                   inv_keep=1.0 / (1.0 - float(dropout_p)))
        cost = pl.CostEstimate(
            flops=3 * B * N, transcendentals=0,
            bytes_accessed=(2 * B * N * itemsize + ROWS * T * itemsize
                            + B * N * 4))
        out2 = pl.pallas_call(
            kernel,
            out_shape=out_shape,
            grid=grid,
            in_specs=[tile_spec, pe_spec, tile_spec],
            out_specs=tile_spec,
            compiler_params=compiler_params,
            cost_estimate=cost,
        )(x2, pe2, u2)

    return out2.reshape(B, S, E)


# --------------------------- demo / checks -----------------------------------


if __name__ == "__main__":
    # Shapes consistent with the module: batch=2, seq=8, emb_dim=32.
    B, S, E = 2, 8, 32
    MAX_LEN = 512

    key = jax.random.PRNGKey(0)
    k_x, k_x2, k_drop = jax.random.split(key, 3)
    x = jax.random.normal(k_x, (B, S, E), dtype=jnp.float32)
    pos_encoding = _build_pos_encoding(E, MAX_LEN)

    # Eval-mode forward (dropout is identity), matches module.eval() semantics.
    out = positional_encoding_forward(x, pos_encoding, dropout_p=0.1, train=False)
    out = jax.block_until_ready(out)
    ref = x + pos_encoding[:S, :][None, :, :]
    assert out.shape == (B, S, E)
    assert jnp.allclose(out, ref, atol=1e-6, rtol=1e-6), "eval mismatch vs reference"

    # Coverage for the multi-tile + ragged-last-block path (small block budget
    # forces 2 row tiles over a 5x32x32 input; resident-pe index_map exercised).
    B2, S2 = 5, 32
    x_big = jax.random.normal(k_x2, (B2, S2, E), dtype=jnp.float32)
    out_big = positional_encoding_forward(x_big, pos_encoding, train=False,
                                          target_block_bytes=8192)
    out_big = jax.block_until_ready(out_big)
    ref_big = x_big + pos_encoding[:S2, :][None, :, :]
    assert jnp.allclose(out_big, ref_big, atol=1e-6, rtol=1e-6), \
        "multi-tile eval mismatch vs reference"

    # Training-mode forward: exercises the dropout path (precomputed uniforms).
    p = 0.1
    out_tr = positional_encoding_forward(x, pos_encoding, dropout_p=p,
                                         train=True, rng_key=k_drop)
    out_tr = jax.block_until_ready(out_tr)
    assert out_tr.shape == (B, S, E)
    kept = out_tr != 0.0
    # Kept elements equal (x + pe) / (1 - p); dropped elements are exactly 0.
    assert jnp.allclose(jnp.where(kept, out_tr * (1.0 - p), 0.0),
                        jnp.where(kept, ref, 0.0), atol=1e-5, rtol=1e-5)
    frac_dropped = 1.0 - float(jnp.mean(kept.astype(jnp.float32)))
    assert 0.0 <= frac_dropped <= 0.35, "dropout fraction implausible"

    print("KERNEL_OK")
</pallas_src>

<mosaic_0001>
module attributes {stable_mosaic.version = 11 : i64} {
  func.func @_pe_add_kernel(%arg0: i32, %arg1: memref<2x256xf32, #tpu.memory_space<vmem>>, %arg2: memref<2x256xf32, #tpu.memory_space<vmem>>, %arg3: memref<2x256xf32, #tpu.memory_space<vmem>>) attributes {dimension_semantics = [#tpu.dimension_semantics<parallel>], iteration_bounds = array<i64: 1>, scalar_prefetch = 0 : i64, scratch_operands = 0 : i64, tpu.core_type = #tpu.core_type<tc>, window_params = [{transform_indices = @transform_0, window_bounds = array<i64: 2, 256>}, {pipeline_mode = #tpu.pipeline_mode<synchronous>, transform_indices = @transform_1, window_bounds = array<i64: 2, 256>}, {transform_indices = @transform_2, window_bounds = array<i64: 2, 256>}]} {
    %c0 = arith.constant 0 : index
    %c0_0 = arith.constant 0 : index
    %0 = vector.load %arg1[%c0, %c0_0] : memref<2x256xf32, #tpu.memory_space<vmem>>, vector<2x256xf32>
    %c0_1 = arith.constant 0 : index
    %c0_2 = arith.constant 0 : index
    %1 = vector.load %arg2[%c0_1, %c0_2] : memref<2x256xf32, #tpu.memory_space<vmem>>, vector<2x256xf32>
    %2 = arith.addf %0, %1 : vector<2x256xf32>
    %c0_3 = arith.constant 0 : index
    %c0_4 = arith.constant 0 : index
    %3 = vector.load %arg3[%c0_3, %c0_4] : memref<2x256xf32, #tpu.memory_space<vmem>>, vector<2x256xf32>
    tpu.vector_store %arg3[%c0_3, %c0_4], %2 {strides = array<i32>} : memref<2x256xf32, #tpu.memory_space<vmem>>, vector<2x256xf32>,
    return
  }
  func.func @transform_0(%arg0: i32) -> (i32, i32) {
    %c0_i32 = arith.constant 0 : i32
    %c0_i32_0 = arith.constant 0 : i32
    return %arg0, %c0_i32 : i32, i32
  }
  func.func @transform_1(%arg0: i32) -> (i32, i32) {
    %c0_i32 = arith.constant 0 : i32
    %c0_i32_0 = arith.constant 0 : i32
    %c0_i32_1 = arith.constant 0 : i32
    return %c0_i32, %c0_i32_0 : i32, i32
  }
  func.func @transform_2(%arg0: i32) -> (i32, i32) {
    %c0_i32 = arith.constant 0 : i32
    %c0_i32_0 = arith.constant 0 : i32
    return %arg0, %c0_i32 : i32, i32
  }
}

</mosaic_0001>

<llo_original>
// kernel: tpu_custom_call.1
$region0: #{tpu_custom_call.1}
  #allocation0 [shape = 'u32[]', space=smem, size = 0x4, offset = 0x4, fixed_abs, tag = 'smem constant byte address 0x4 - core index']
  #allocation1 [shape = 'u32[144,128]{1,0:T(1,128)}', space=vmem, size = 0x12000, scoped, tag = 'internal scratch']
  %s0 = inlined_call_operand.hbm [shape: f32[2,256], index: 0, kind: input, shape index: {}]
  %s1 = inlined_call_operand.hbm [shape: f32[2,256], index: 1, kind: input, shape index: {}]
  %s2 = inlined_call_operand.hbm [shape: f32[2,256], index: 2, kind: output, shape index: {}]
  %s3 = sld [smem:[#allocation0]]
  $region26: #{tpu_custom_call.1} parent=0
    _
  %s5 = ssub.s32 1, %s3
  %s6 = scalar_select 0, %s5, %s3
  $region1: #{tpu_custom_call.1} parent=0
    #allocation2 [shape = 'u8[2048]{0}', space=vmem, size = 0x800, scoped, tag = 'input window, operand 0, single buffered']
    #allocation3 [shape = 's32[1]{0}', space=sflag, size = 0x4, scoped, tag = 'scoped memory for tpu_custom_call.1']
    #allocation4 [shape = 's32[1]{0}', space=sflag, size = 0x4, scoped, tag = 'scoped memory for tpu_custom_call.1']
    #allocation5 [shape = 'u8[2048]{0}', space=vmem, size = 0x800, scoped, tag = 'input window, operand 1, single buffered']
    #allocation6 [shape = 's32[1]{0}', space=sflag, size = 0x4, scoped, tag = 'scoped memory for tpu_custom_call.1']
    #allocation7 [shape = 'u8[2048]{0}', space=vmem, size = 0x800, scoped, tag = 'output window, operand 0, single buffered']
    %7 = vsyncpa [#allocation3], 0
    %8 = vsyncpa [#allocation6], 0
    %9 = vsyncpa [#allocation4], 0
    // Predicated region
    $region2: #{tpu_custom_call.1} parent=1 // pred_check
      _
    $region3: #{tpu_custom_call.1} parent=1 // pred_check_branch
      %11 = sbr.rel (0) target = $region5
    $region4: #{tpu_custom_call.1} parent=1 // pred_region
      %s13 = ssub.s32 64, 64
      %14 = vsyncadd [#allocation3], %s13
      %s16 = sshll.u32 [#allocation2], 4
      %s17 = int_to_ptr.vmem [resolvable:$true] %s16
      %19 = dma.hbm_to_vmem [thread:$0]  %s0, 64, %s17, [#allocation3]
    $region5: #{tpu_custom_call.1} parent=1 // pred_fallthru
      _
    // Predicated region
    $region6: #{tpu_custom_call.1} parent=1 // pred_check
      _
    $region7: #{tpu_custom_call.1} parent=1 // pred_check_branch
      %21 = sbr.rel (0) target = $region9
    $region8: #{tpu_custom_call.1} parent=1 // pred_region
      %s23 = ssub.s32 64, 64
      %24 = vsyncadd [#allocation6], %s23
      %s26 = sshll.u32 [#allocation5], 4
      %s27 = int_to_ptr.vmem [resolvable:$true] %s26
      %29 = dma.hbm_to_vmem [thread:$0]  %s1, 64, %s27, [#allocation6]
    $region9: #{tpu_custom_call.1} parent=1 // pred_fallthru
      _
    // Predicated region
    $region10: #{tpu_custom_call.1} parent=1 // pred_check
      _
    $region11: #{tpu_custom_call.1} parent=1 // pred_check_branch
      %31 = sbr.rel (0) target = $region13
    $region12: #{tpu_custom_call.1} parent=1 // pred_region
      %32 = dma.done [#allocation3], 64
    $region13: #{tpu_custom_call.1} parent=1 // pred_fallthru
      _
    // Predicated region
    $region14: #{tpu_custom_call.1} parent=1 // pred_check
      _
    $region15: #{tpu_custom_call.1} parent=1 // pred_check_branch
      %34 = sbr.rel (0) target = $region17
    $region16: #{tpu_custom_call.1} parent=1 // pred_region
      %35 = dma.done [#allocation6], 64
    $region17: #{tpu_custom_call.1} parent=1 // pred_fallthru
      _
    %v36 = vld [vmem:[#allocation2] sm:$0xf]
    %v37 = vld [vmem:[#allocation5] sm:$0xf]
    %v38 = vadd.f32 %v36, %v37
    %39 = vst [vmem:[#allocation7] sm:$0xf] %v38
    // Predicated region
    $region18: #{tpu_custom_call.1} parent=1 // pred_check
      _
    $region19: #{tpu_custom_call.1} parent=1 // pred_check_branch
      %41 = sbr.rel (0) target = $region21
    $region20: #{tpu_custom_call.1} parent=1 // pred_region
      %s43 = ssub.s32 64, 64
      %44 = vsyncadd [#allocation4], %s43
      %s46 = sshll.u32 [#allocation7], 4
      %s47 = int_to_ptr.vmem [resolvable:$true] %s46
      %49 = dma.vmem_to_hbm [thread:$0]  %s47, 64, %s2, [#allocation4]
    $region21: #{tpu_custom_call.1} parent=1 // pred_fallthru
      _
    // Predicated region
    $region22: #{tpu_custom_call.1} parent=1 // pred_check
      _
    $region23: #{tpu_custom_call.1} parent=1 // pred_check_branch
      %51 = sbr.rel (0) target = $region25
    $region24: #{tpu_custom_call.1} parent=1 // pred_region
      %52 = dma.done [#allocation4], 64
    $region25: #{tpu_custom_call.1} parent=1 // pred_fallthru
      _
    %53 = vsyncpa [#allocation3], 1
    %54 = vsyncpa [#allocation6], 1
    %55 = vsyncpa [#allocation4], 1

</llo_original>
